<compile_context>
chip_gen: v7x
topology: tpu7x:2x2x1
jax: 0.10.0
libtpu: 0.0.40
codegen_flags: <defaults>
</compile_context>

<pallas_src>
import functools

import jax
import jax.numpy as jnp
import numpy as np
from jax.experimental import pallas as pl
from jax.experimental.pallas import tpu as pltpu

EPS = 1e-5   # PyTorch BatchNorm2d default


# ----------------------------- fused Pallas kernel -------------------------- #

def _fused_block_kernel(x_ref, s1_ref, t1_ref, w1p_ref, s2_ref, t2_ref, w2_ref,
                        o_ref, pad1_ref, pad2_ref, *, dilation, c1_cols):
    """Whole residual block for one batch element, all intermediates in VMEM.

    x_ref  : (1, H, W*Cin)              lane-dense input row-slab
    s*_ref/t*_ref : (1, W*C)            folded BN scale/shift, pre-tiled over W
    w1p_ref: (3*W*Cin, W*C0 + W*C1)     fused [conv1 banded taps | 1x1 proj] weight
    w2_ref : (3*W*C0,  W*C1)            stacked banded conv2 weight
    o_ref  : (1, H, W*C1)               lane-dense output (W*C1 = 128 here)
    pad1_ref/pad2_ref : VMEM scratch (H+2d, W*C) for H zero-padding
    """
    d = dilation
    H = o_ref.shape[1]
    wc_in = pad1_ref.shape[1]
    wc_mid = pad2_ref.shape[1]

    # ---- bn1 = ReLU(x * scale1 + shift1)                        (H, W*Cin) ----
    bn1 = jnp.maximum(x_ref[0] * s1_ref[...] + t1_ref[...], 0.0)

    # ---- conv1 (3x3) + 1x1 projection fused into ONE matmul --------------------
    # Zero only the border rows of the H-padded scratch, then drop bn1 in.
    pad1_ref[0:d, :] = jnp.zeros((d, wc_in), jnp.float32)
    pad1_ref[H + d:H + 2 * d, :] = jnp.zeros((d, wc_in), jnp.float32)
    pad1_ref[d:d + H, :] = bn1
    # Lane-concatenate the three kh row taps -> (H, 3*W*Cin).
    lhs1 = jnp.concatenate(
        [pad1_ref[kh * d:kh * d + H, :] for kh in range(3)], axis=-1)
    fused1 = jnp.dot(lhs1, w1p_ref[...], preferred_element_type=jnp.float32)
    c1 = fused1[:, :c1_cols]          # conv1 output            (H, W*C0)
    shortcut = fused1[:, c1_cols:]    # 1x1 projection output   (H, W*C1)

    # ---- bn2 = ReLU(c1 * scale2 + shift2)                       (H, W*C0) ----
    bn2 = jnp.maximum(c1 * s2_ref[...] + t2_ref[...], 0.0)

    # ---- conv2 (3x3) as ONE matmul, residual add fused -------------------------
    pad2_ref[0:d, :] = jnp.zeros((d, wc_mid), jnp.float32)
    pad2_ref[H + d:H + 2 * d, :] = jnp.zeros((d, wc_mid), jnp.float32)
    pad2_ref[d:d + H, :] = bn2
    lhs2 = jnp.concatenate(
        [pad2_ref[kh * d:kh * d + H, :] for kh in range(3)], axis=-1)
    out = shortcut + jnp.dot(lhs2, w2_ref[...], preferred_element_type=jnp.float32)

    o_ref[...] = out[None].astype(o_ref.dtype)


# ------------------------ wrapper-side weight preprocessing ------------------ #

def _fold_bn(gamma, beta, mean, var):
    scale = gamma / jnp.sqrt(var + EPS)
    shift = beta - mean * scale
    return scale, shift                      # (C,) each


def _block_diag_1x1_weight(w_io, width):
    """(Ci, Co) -> (width*Ci, width*Co) block-diagonal matrix for a 1x1 conv."""
    eye = jnp.eye(width, dtype=w_io.dtype)
    bd = jnp.einsum('io,cf->icof', eye, w_io)            # (W, Ci, W, Co)
    return bd.reshape(width * w_io.shape[0], width * w_io.shape[1])


def _banded_3x3_weight(w_hwio, width, dilation):
    """(3, 3, Ci, Co) -> (3, width*Ci, width*Co) lane-banded weights.

    bw[kh, i*Ci+c, o*Co+f] = w[kh, kw, c, f] where i == o + (kw-1)*dilation,
    out-of-range W taps dropped (== zero padding in W).
    """
    _, _, Ci, Co = w_hwio.shape
    w_in = jnp.arange(width)
    w_out = jnp.arange(width)
    kw_off = (jnp.arange(3) - 1) * dilation
    sel = (w_in[None, :, None] ==
           (w_out[None, None, :] + kw_off[:, None, None])).astype(w_hwio.dtype)
    bw = jnp.einsum('kio,hkcf->hicof', sel, w_hwio)       # (3, W, Ci, W, Co)
    return bw.reshape(3, width * Ci, width * Co)


def _fused_conv1_proj_weight(w1_hwio, wp_io, width, dilation):
    """Stack the three conv1 row taps on K and append 1x1 proj output columns.

    Returns (3*W*Ci, W*C0 + W*C1); the proj weight sits in the centre-tap rows
    (the centre tap multiplies the unshifted bn1), zeros elsewhere.
    """
    Ci, C0 = w1_hwio.shape[2], w1_hwio.shape[3]
    C1 = wp_io.shape[1]
    WCi, WC0, WC1 = width * Ci, width * C0, width * C1
    w1_stk = _banded_3x3_weight(w1_hwio, width, dilation).reshape(3 * WCi, WC0)
    proj_cols = jnp.zeros((3 * WCi, WC1), w1_stk.dtype)
    proj_cols = proj_cols.at[WCi:2 * WCi, :].set(_block_diag_1x1_weight(wp_io, width))
    return jnp.concatenate([w1_stk, proj_cols], axis=1)   # (3*WCi, WC0+WC1)


# --------------------------------- forward ---------------------------------- #

def identity_residual_block_forward(x_nchw, params, *, dilation=1):
    N, Cin, H, W = x_nchw.shape
    C0 = params['w1'].shape[3]
    C1 = params['w2'].shape[3]
    d = dilation

    # NCHW (PyTorch) -> lane-dense (N, H, W*Cin)
    x = jnp.transpose(x_nchw, (0, 2, 3, 1)).reshape(N, H, W * Cin)

    s1, t1 = _fold_bn(params['gamma1'], params['beta1'],
                      params['mean1'], params['var1'])
    s2, t2 = _fold_bn(params['gamma2'], params['beta2'],
                      params['mean2'], params['var2'])
    s1w = jnp.tile(s1, W).reshape(1, W * Cin)
    t1w = jnp.tile(t1, W).reshape(1, W * Cin)
    s2w = jnp.tile(s2, W).reshape(1, W * C0)
    t2w = jnp.tile(t2, W).reshape(1, W * C0)

    w1p = _fused_conv1_proj_weight(params['w1'], params['w_proj'], W, d)  # (3*W*Cin, W*(C0+C1))
    w2s = _banded_3x3_weight(params['w2'], W, d).reshape(3 * W * C0, W * C1)

    kern = functools.partial(_fused_block_kernel, dilation=d, c1_cols=W * C0)
    out = pl.pallas_call(
        kern,
        out_shape=jax.ShapeDtypeStruct((N, H, W * C1), x_nchw.dtype),
        grid_spec=pltpu.PrefetchScalarGridSpec(
            num_scalar_prefetch=0,
            grid=(N,),
            in_specs=[
                pl.BlockSpec((1, H, W * Cin), lambda n: (n, 0, 0)),            # x
                pl.BlockSpec((1, W * Cin), lambda n: (0, 0)),                  # scale1
                pl.BlockSpec((1, W * Cin), lambda n: (0, 0)),                  # shift1
                pl.BlockSpec((3 * W * Cin, W * (C0 + C1)), lambda n: (0, 0)),  # conv1+proj weight
                pl.BlockSpec((1, W * C0), lambda n: (0, 0)),                   # scale2
                pl.BlockSpec((1, W * C0), lambda n: (0, 0)),                   # shift2
                pl.BlockSpec((3 * W * C0, W * C1), lambda n: (0, 0)),          # conv2 weight
            ],
            out_specs=pl.BlockSpec((1, H, W * C1), lambda n: (n, 0, 0)),
            scratch_shapes=[
                pltpu.VMEM((H + 2 * d, W * Cin), jnp.float32),   # bn1 row-padded
                pltpu.VMEM((H + 2 * d, W * C0), jnp.float32),    # bn2 row-padded
            ]),
        compiler_params=pltpu.CompilerParams(dimension_semantics=("parallel",)),
    )(x, s1w, t1w, w1p, s2w, t2w, w2s)

    # lane-dense (N, H, W*C1) -> NCHW
    return jnp.transpose(out.reshape(N, H, W, C1), (0, 3, 1, 2))


# ----------------------------- params (PyTorch-style) ------------------------ #

def init_params(key, in_channels, channels):
    c0, c1 = channels
    ks = jax.random.split(key, 5)

    def bn_params(k, c):
        k1, k2, k3, k4 = jax.random.split(k, 4)
        gamma = 1.0 + 0.1 * jax.random.normal(k1, (c,), jnp.float32)
        beta = 0.1 * jax.random.normal(k2, (c,), jnp.float32)
        mean = 0.1 * jax.random.normal(k3, (c,), jnp.float32)
        var = 1.0 + 0.1 * jax.random.uniform(k4, (c,), jnp.float32)
        return gamma, beta, mean, var

    g1, b1, m1, v1 = bn_params(ks[0], in_channels)
    g2, b2, m2, v2 = bn_params(ks[1], c0)
    # PyTorch conv weights are (Cout, Cin, kh, kw); kernels use (kh, kw, Cin, Cout).
    w1_t = 0.2 * jax.random.normal(ks[2], (c0, in_channels, 3, 3), jnp.float32)
    w2_t = 0.2 * jax.random.normal(ks[3], (c1, c0, 3, 3), jnp.float32)
    wproj_t = 0.2 * jax.random.normal(ks[4], (c1, in_channels, 1, 1), jnp.float32)
    return dict(
        gamma1=g1, beta1=b1, mean1=m1, var1=v1,
        gamma2=g2, beta2=b2, mean2=m2, var2=v2,
        w1=jnp.transpose(w1_t, (2, 3, 1, 0)),               # (3,3,Cin,C0)  HWIO
        w2=jnp.transpose(w2_t, (2, 3, 1, 0)),               # (3,3,C0,C1)   HWIO
        w_proj=jnp.transpose(wproj_t, (2, 3, 1, 0))[0, 0],  # (Cin,C1)
    )


# ------------------------------- reference (JAX) ----------------------------- #

def _conv_ref(x, w, pad, dilation=1):
    return jax.lax.conv_general_dilated(
        x, w, window_strides=(1, 1),
        padding=((pad, pad), (pad, pad)),
        rhs_dilation=(dilation, dilation),
        dimension_numbers=('NHWC', 'HWIO', 'NHWC'))


def reference_forward(x_nchw, params, *, dilation=1):
    x = jnp.transpose(x_nchw, (0, 2, 3, 1))
    s1, t1 = _fold_bn(params['gamma1'], params['beta1'],
                      params['mean1'], params['var1'])
    bn1 = jnp.maximum(x * s1 + t1, 0.0)
    shortcut = _conv_ref(bn1, params['w_proj'].reshape(1, 1, *params['w_proj'].shape),
                         pad=0)
    c1 = _conv_ref(bn1, params['w1'], pad=dilation, dilation=dilation)
    s2, t2 = _fold_bn(params['gamma2'], params['beta2'],
                      params['mean2'], params['var2'])
    bn2 = jnp.maximum(c1 * s2 + t2, 0.0)
    out = _conv_ref(bn2, params['w2'], pad=dilation, dilation=dilation) + shortcut
    return jnp.transpose(out, (0, 3, 1, 2))


# ------------------------------------ main ----------------------------------- #

if __name__ == "__main__":
    key = jax.random.PRNGKey(0)
    kx, kp = jax.random.split(key)

    N, Cin, H, W = 2, 4, 16, 16
    channels = [8, 8]
    x = jax.random.normal(kx, (N, Cin, H, W), jnp.float32)   # NCHW like PyTorch

    params = init_params(kp, Cin, channels)

    fwd = jax.jit(functools.partial(identity_residual_block_forward, dilation=1))
    out = jax.block_until_ready(fwd(x, params))

    ref = jax.block_until_ready(reference_forward(x, params, dilation=1))
    np.testing.assert_allclose(np.asarray(out), np.asarray(ref),
                               rtol=1e-4, atol=1e-4)
    assert out.shape == (N, channels[-1], H, W)

    print("KERNEL_OK")
</pallas_src>

<mosaic_0001>
module attributes {stable_mosaic.version = 11 : i64} {
  func.func @_fused_block_kernel(%arg0: i32, %arg1: memref<1x16x64xf32, #tpu.memory_space<vmem>>, %arg2: memref<1x64xf32, #tpu.memory_space<vmem>>, %arg3: memref<1x64xf32, #tpu.memory_space<vmem>>, %arg4: memref<192x256xf32, #tpu.memory_space<vmem>>, %arg5: memref<1x128xf32, #tpu.memory_space<vmem>>, %arg6: memref<1x128xf32, #tpu.memory_space<vmem>>, %arg7: memref<384x128xf32, #tpu.memory_space<vmem>>, %arg8: memref<1x16x128xf32, #tpu.memory_space<vmem>>, %arg9: memref<18x64xf32, #tpu.memory_space<vmem>>, %arg10: memref<18x128xf32, #tpu.memory_space<vmem>>) attributes {dimension_semantics = [#tpu.dimension_semantics<parallel>], iteration_bounds = array<i64: 2>, scalar_prefetch = 0 : i64, scratch_operands = 2 : i64, tpu.core_type = #tpu.core_type<tc>, window_params = [{transform_indices = @transform_0, window_bounds = array<i64: 1, 16, 64>}, {pipeline_mode = #tpu.pipeline_mode<synchronous>, transform_indices = @transform_1, window_bounds = array<i64: 1, 64>}, {pipeline_mode = #tpu.pipeline_mode<synchronous>, transform_indices = @transform_2, window_bounds = array<i64: 1, 64>}, {pipeline_mode = #tpu.pipeline_mode<synchronous>, transform_indices = @transform_3, window_bounds = array<i64: 192, 256>}, {pipeline_mode = #tpu.pipeline_mode<synchronous>, transform_indices = @transform_4, window_bounds = array<i64: 1, 128>}, {pipeline_mode = #tpu.pipeline_mode<synchronous>, transform_indices = @transform_5, window_bounds = array<i64: 1, 128>}, {pipeline_mode = #tpu.pipeline_mode<synchronous>, transform_indices = @transform_6, window_bounds = array<i64: 384, 128>}, {transform_indices = @transform_7, window_bounds = array<i64: 1, 16, 128>}]} {
    %c0 = arith.constant 0 : index
    %c0_0 = arith.constant 0 : index
    %c0_1 = arith.constant 0 : index
    %0 = vector.load %arg1[%c0, %c0_0, %c0_1] : memref<1x16x64xf32, #tpu.memory_space<vmem>>, vector<1x16x64xf32>
    %1 = vector.shape_cast %0 : vector<1x16x64xf32> to vector<16x64xf32>
    %c0_2 = arith.constant 0 : index
    %c0_3 = arith.constant 0 : index
    %2 = vector.load %arg2[%c0_2, %c0_3] : memref<1x64xf32, #tpu.memory_space<vmem>>, vector<1x64xf32>
    %3 = vector.broadcast %2 : vector<1x64xf32> to vector<16x64xf32>
    %4 = arith.mulf %1, %3 : vector<16x64xf32>
    %c0_4 = arith.constant 0 : index
    %c0_5 = arith.constant 0 : index
    %5 = vector.load %arg3[%c0_4, %c0_5] : memref<1x64xf32, #tpu.memory_space<vmem>>, vector<1x64xf32>
    %6 = vector.broadcast %5 : vector<1x64xf32> to vector<16x64xf32>
    %7 = arith.addf %4, %6 : vector<16x64xf32>
    %cst = arith.constant 0.000000e+00 : f32
    %8 = vector.broadcast %cst : f32 to vector<16x64xf32>
    %9 = arith.maximumf %7, %8 : vector<16x64xf32>
    %cst_6 = arith.constant 0.000000e+00 : f32
    %10 = vector.broadcast %cst_6 : f32 to vector<1x64xf32>
    %c0_7 = arith.constant 0 : index
    %c0_8 = arith.constant 0 : index
    %11 = vector.load %arg9[%c0_7, %c0_8] : memref<18x64xf32, #tpu.memory_space<vmem>>, vector<1x64xf32>
    tpu.vector_store %arg9[%c0_7, %c0_8], %10 {strides = array<i32>} : memref<18x64xf32, #tpu.memory_space<vmem>>, vector<1x64xf32>,
    %cst_9 = arith.constant 0.000000e+00 : f32
    %12 = vector.broadcast %cst_9 : f32 to vector<1x64xf32>
    %c17 = arith.constant 17 : index
    %c0_10 = arith.constant 0 : index
    %13 = vector.load %arg9[%c17, %c0_10] : memref<18x64xf32, #tpu.memory_space<vmem>>, vector<1x64xf32>
    tpu.vector_store %arg9[%c17, %c0_10], %12 {strides = array<i32>} : memref<18x64xf32, #tpu.memory_space<vmem>>, vector<1x64xf32>,
    %c1 = arith.constant 1 : index
    %c0_11 = arith.constant 0 : index
    %14 = vector.load %arg9[%c1, %c0_11] : memref<18x64xf32, #tpu.memory_space<vmem>>, vector<16x64xf32>
    tpu.vector_store %arg9[%c1, %c0_11], %9 {strides = array<i32>} : memref<18x64xf32, #tpu.memory_space<vmem>>, vector<16x64xf32>,
    %c0_12 = arith.constant 0 : index
    %c0_13 = arith.constant 0 : index
    %15 = vector.load %arg9[%c0_12, %c0_13] : memref<18x64xf32, #tpu.memory_space<vmem>>, vector<16x64xf32>
    %c1_14 = arith.constant 1 : index
    %c0_15 = arith.constant 0 : index
    %16 = vector.load %arg9[%c1_14, %c0_15] : memref<18x64xf32, #tpu.memory_space<vmem>>, vector<16x64xf32>
    %c2 = arith.constant 2 : index
    %c0_16 = arith.constant 0 : index
    %17 = vector.load %arg9[%c2, %c0_16] : memref<18x64xf32, #tpu.memory_space<vmem>>, vector<16x64xf32>
    %18 = tpu.concatenate %15, %16, %17 in 1 : vector<16x64xf32>, vector<16x64xf32>, vector<16x64xf32> -> vector<16x192xf32>
    %c0_17 = arith.constant 0 : index
    %c0_18 = arith.constant 0 : index
    %19 = vector.load %arg4[%c0_17, %c0_18] : memref<192x256xf32, #tpu.memory_space<vmem>>, vector<192x256xf32>
    %cst_19 = arith.constant dense<0.000000e+00> : vector<16x256xf32>
    %20 = tpu.matmul %18, %19, %cst_19 {dimension_numbers = #tpu.dot_dimension_numbers<[1], [0], [0], [1], [0, 0, 1, 1], [], []>} : vector<16x192xf32>, vector<192x256xf32>, vector<16x256xf32> -> vector<16x256xf32>
    %21 = vector.extract_strided_slice %20 {offsets = [0, 0], sizes = [16, 128], strides = [1, 1]} : vector<16x256xf32> to vector<16x128xf32>
    %22 = vector.extract_strided_slice %20 {offsets = [0, 128], sizes = [16, 128], strides = [1, 1]} : vector<16x256xf32> to vector<16x128xf32>
    %c0_20 = arith.constant 0 : index
    %c0_21 = arith.constant 0 : index
    %23 = vector.load %arg5[%c0_20, %c0_21] : memref<1x128xf32, #tpu.memory_space<vmem>>, vector<1x128xf32>
    %24 = vector.broadcast %23 : vector<1x128xf32> to vector<16x128xf32>
    %25 = arith.mulf %21, %24 : vector<16x128xf32>
    %c0_22 = arith.constant 0 : index
    %c0_23 = arith.constant 0 : index
    %26 = vector.load %arg6[%c0_22, %c0_23] : memref<1x128xf32, #tpu.memory_space<vmem>>, vector<1x128xf32>
    %27 = vector.broadcast %26 : vector<1x128xf32> to vector<16x128xf32>
    %28 = arith.addf %25, %27 : vector<16x128xf32>
    %cst_24 = arith.constant 0.000000e+00 : f32
    %29 = vector.broadcast %cst_24 : f32 to vector<16x128xf32>
    %30 = arith.maximumf %28, %29 : vector<16x128xf32>
    %cst_25 = arith.constant 0.000000e+00 : f32
    %31 = vector.broadcast %cst_25 : f32 to vector<1x128xf32>
    %c0_26 = arith.constant 0 : index
    %c0_27 = arith.constant 0 : index
    %32 = vector.load %arg10[%c0_26, %c0_27] : memref<18x128xf32, #tpu.memory_space<vmem>>, vector<1x128xf32>
    tpu.vector_store %arg10[%c0_26, %c0_27], %31 {strides = array<i32>} : memref<18x128xf32, #tpu.memory_space<vmem>>, vector<1x128xf32>,
    %cst_28 = arith.constant 0.000000e+00 : f32
    %33 = vector.broadcast %cst_28 : f32 to vector<1x128xf32>
    %c17_29 = arith.constant 17 : index
    %c0_30 = arith.constant 0 : index
    %34 = vector.load %arg10[%c17_29, %c0_30] : memref<18x128xf32, #tpu.memory_space<vmem>>, vector<1x128xf32>
    tpu.vector_store %arg10[%c17_29, %c0_30], %33 {strides = array<i32>} : memref<18x128xf32, #tpu.memory_space<vmem>>, vector<1x128xf32>,
    %c1_31 = arith.constant 1 : index
    %c0_32 = arith.constant 0 : index
    %35 = vector.load %arg10[%c1_31, %c0_32] : memref<18x128xf32, #tpu.memory_space<vmem>>, vector<16x128xf32>
    tpu.vector_store %arg10[%c1_31, %c0_32], %30 {strides = array<i32>} : memref<18x128xf32, #tpu.memory_space<vmem>>, vector<16x128xf32>,
    %c0_33 = arith.constant 0 : index
    %c0_34 = arith.constant 0 : index
    %36 = vector.load %arg10[%c0_33, %c0_34] : memref<18x128xf32, #tpu.memory_space<vmem>>, vector<16x128xf32>
    %c1_35 = arith.constant 1 : index
    %c0_36 = arith.constant 0 : index
    %37 = vector.load %arg10[%c1_35, %c0_36] : memref<18x128xf32, #tpu.memory_space<vmem>>, vector<16x128xf32>
    %c2_37 = arith.constant 2 : index
    %c0_38 = arith.constant 0 : index
    %38 = vector.load %arg10[%c2_37, %c0_38] : memref<18x128xf32, #tpu.memory_space<vmem>>, vector<16x128xf32>
    %39 = tpu.concatenate %36, %37, %38 in 1 : vector<16x128xf32>, vector<16x128xf32>, vector<16x128xf32> -> vector<16x384xf32>
    %c0_39 = arith.constant 0 : index
    %c0_40 = arith.constant 0 : index
    %40 = vector.load %arg7[%c0_39, %c0_40] : memref<384x128xf32, #tpu.memory_space<vmem>>, vector<384x128xf32>
    %cst_41 = arith.constant dense<0.000000e+00> : vector<16x128xf32>
    %41 = tpu.matmul %39, %40, %cst_41 {dimension_numbers = #tpu.dot_dimension_numbers<[1], [0], [0], [1], [0, 0, 1, 1], [], []>} : vector<16x384xf32>, vector<384x128xf32>, vector<16x128xf32> -> vector<16x128xf32>
    %42 = arith.addf %22, %41 : vector<16x128xf32>
    %43 = vector.shape_cast %42 : vector<16x128xf32> to vector<1x16x128xf32>
    %c0_42 = arith.constant 0 : index
    %c0_43 = arith.constant 0 : index
    %c0_44 = arith.constant 0 : index
    %44 = vector.load %arg8[%c0_42, %c0_43, %c0_44] : memref<1x16x128xf32, #tpu.memory_space<vmem>>, vector<1x16x128xf32>
    tpu.vector_store %arg8[%c0_42, %c0_43, %c0_44], %43 {strides = array<i32>} : memref<1x16x128xf32, #tpu.memory_space<vmem>>, vector<1x16x128xf32>,
    return
  }
  func.func @transform_0(%arg0: i32) -> (i32, i32, i32) {
    %c0_i32 = arith.constant 0 : i32
    %c0_i32_0 = arith.constant 0 : i32
    %c0_i32_1 = arith.constant 0 : i32
    return %arg0, %c0_i32, %c0_i32_0 : i32, i32, i32
  }
  func.func @transform_1(%arg0: i32) -> (i32, i32) {
    %c0_i32 = arith.constant 0 : i32
    %c0_i32_0 = arith.constant 0 : i32
    %c0_i32_1 = arith.constant 0 : i32
    return %c0_i32, %c0_i32_0 : i32, i32
  }
  func.func @transform_2(%arg0: i32) -> (i32, i32) {
    %c0_i32 = arith.constant 0 : i32
    %c0_i32_0 = arith.constant 0 : i32
    %c0_i32_1 = arith.constant 0 : i32
    return %c0_i32, %c0_i32_0 : i32, i32
  }
  func.func @transform_3(%arg0: i32) -> (i32, i32) {
    %c0_i32 = arith.constant 0 : i32
    %c0_i32_0 = arith.constant 0 : i32
    %c0_i32_1 = arith.constant 0 : i32
    return %c0_i32, %c0_i32_0 : i32, i32
  }
  func.func @transform_4(%arg0: i32) -> (i32, i32) {
    %c0_i32 = arith.constant 0 : i32
    %c0_i32_0 = arith.constant 0 : i32
    %c0_i32_1 = arith.constant 0 : i32
    return %c0_i32, %c0_i32_0 : i32, i32
  }
  func.func @transform_5(%arg0: i32) -> (i32, i32) {
    %c0_i32 = arith.constant 0 : i32
    %c0_i32_0 = arith.constant 0 : i32
    %c0_i32_1 = arith.constant 0 : i32
    return %c0_i32, %c0_i32_0 : i32, i32
  }
  func.func @transform_6(%arg0: i32) -> (i32, i32) {
    %c0_i32 = arith.constant 0 : i32
    %c0_i32_0 = arith.constant 0 : i32
    %c0_i32_1 = arith.constant 0 : i32
    return %c0_i32, %c0_i32_0 : i32, i32
  }
  func.func @transform_7(%arg0: i32) -> (i32, i32, i32) {
    %c0_i32 = arith.constant 0 : i32
    %c0_i32_0 = arith.constant 0 : i32
    %c0_i32_1 = arith.constant 0 : i32
    return %arg0, %c0_i32, %c0_i32_0 : i32, i32, i32
  }
}

</mosaic_0001>

<llo_original>
// kernel: tile.23
$region0: #{tile.23}
  #allocation0 [shape = 's32[1]{0}', space=sflag, size = 0x4, scoped, tag = 'scoped memory for tile.23']
  %s0 = inlined_call_operand.vmem [shape: f32[4], index: 0, kind: input, shape index: {}]
  %s1 = inlined_call_operand.vmem [shape: f32[16,4], index: 1, kind: output, shape index: {}]
  // Predicated region
  $region2: #{tile.23} parent=0 // pred_check
    _
  $region3: #{tile.23} parent=0 // pred_check_branch
    %3 = sbr.rel (0) target = $region5
  $region4: #{tile.23} parent=0 // pred_region
    _
  $region5: #{tile.23} parent=0 // pred_fallthru
    _
  %v4 = vld [vmem:[%s0] ss:$0 sm:$0xff]
  %5 = vst [vmem:[%s1] sm:$0xff] %v4
  %s6 = scalar_lea.vmem %s1, 8
  %7 = vst [vmem:[%s6] sm:$0xff] %v4

// kernel: tile.24
$region0: #{tile.24}
  %s0 = inlined_call_operand.vmem [shape: f32[16,4], index: 0, kind: input, shape index: {}]
  %s1 = inlined_call_operand.vmem [shape: f32[1,64], index: 1, kind: output, shape index: {}]
  $region1: #{tile.24} parent=0
    #allocation0 [shape = 'u8[4096]{0}', space=vmem, size = 0x1000, scoped, tag = 'scoped mem for output reshape']
    %v2 = vld [vmem:[%s0] sm:$0x1]
    %vm3 = vcmask 31744
    %4 = vst.msk [vmem:[#allocation0] sm:$0x1] %vm3, %v2
    %s5 = scalar_lea.vmem %s0, 15
    %v6 = vld [vmem:[%s5] sm:$0x1]
    %7 = vrot.lane.b32.xlu0 %v6, 60
    %v8 = vpop.permute.xlu0 %7
    %vm9 = vcmask 523744
    %10 = vst.msk [vmem:[#allocation0] sm:$0x1] %vm9, %v8
    %s11 = scalar_lea.vmem %s0, 14
    %v12 = vld [vmem:[%s11] sm:$0x1]
    %13 = vrot.lane.b32.xlu0 %v12, 56
    %v14 = vpop.permute.xlu0 %13
    %vm15 = vcmask 490944
    %16 = vst.msk [vmem:[#allocation0] sm:$0x1] %vm15, %v14
    %s17 = scalar_lea.vmem %s0, 13
    %v18 = vld [vmem:[%s17] sm:$0x1]
    %19 = vrot.lane.b32.xlu0 %v18, 52
    %v20 = vpop.permute.xlu0 %19
    %vm21 = vcmask 458144
    %22 = vst.msk [vmem:[#allocation0] sm:$0x1] %vm21, %v20
    %s23 = scalar_lea.vmem %s0, 12
    %v24 = vld [vmem:[%s23] sm:$0x1]
    %25 = vrot.lane.b32.xlu0 %v24, 48
    %v26 = vpop.permute.xlu0 %25
    %vm27 = vcmask 425344
    %28 = vst.msk [vmem:[#allocation0] sm:$0x1] %vm27, %v26
    %s29 = scalar_lea.vmem %s0, 11
    %v30 = vld [vmem:[%s29] sm:$0x1]
    %31 = vrot.lane.b32.xlu0 %v30, 44
    %v32 = vpop.permute.xlu0 %31
    %vm33 = vcmask 392544
    %34 = vst.msk [vmem:[#allocation0] sm:$0x1] %vm33, %v32
    %s35 = scalar_lea.vmem %s0, 10
    %v36 = vld [vmem:[%s35] sm:$0x1]
    %37 = vrot.lane.b32.xlu0 %v36, 40
    %v38 = vpop.permute.xlu0 %37
    %vm39 = vcmask 359744
    %40 = vst.msk [vmem:[#allocation0] sm:$0x1] %vm39, %v38
    %s41 = scalar_lea.vmem %s0, 9
    %v42 = vld [vmem:[%s41] sm:$0x1]
    %43 = vrot.lane.b32.xlu0 %v42, 36
    %v44 = vpop.permute.xlu0 %43
    %vm45 = vcmask 326944
    %46 = vst.msk [vmem:[#allocation0] sm:$0x1] %vm45, %v44
    %s47 = scalar_lea.vmem %s0, 8
    %v48 = vld [vmem:[%s47] sm:$0x1]
    %49 = vrot.lane.b32.xlu0 %v48, 32
    %v50 = vpop.permute.xlu0 %49
    %vm51 = vcmask 294144
    %52 = vst.msk [vmem:[#allocation0] sm:$0x1] %vm51, %v50
    %s53 = scalar_lea.vmem %s0, 7
    %v54 = vld [vmem:[%s53] sm:$0x1]
    %55 = vrot.lane.b32.xlu0 %v54, 28
    %v56 = vpop.permute.xlu0 %55
    %vm57 = vcmask 261344
    %58 = vst.msk [vmem:[#allocation0] sm:$0x1] %vm57, %v56
    %s59 = scalar_lea.vmem %s0, 6
    %v60 = vld [vmem:[%s59] sm:$0x1]
    %61 = vrot.lane.b32.xlu0 %v60, 24
    %v62 = vpop.permute.xlu0 %61
    %vm63 = vcmask 228544
    %64 = vst.msk [vmem:[#allocation0] sm:$0x1] %vm63, %v62
    %s65 = scalar_lea.vmem %s0, 5
    %v66 = vld [vmem:[%s65] sm:$0x1]
    %67 = vrot.lane.b32.xlu0 %v66, 20
    %v68 = vpop.permute.xlu0 %67
    %vm69 = vcmask 195744
    %70 = vst.msk [vmem:[#allocation0] sm:$0x1] %vm69, %v68
    %s71 = scalar_lea.vmem %s0, 4
    %v72 = vld [vmem:[%s71] sm:$0x1]
    %73 = vrot.lane.b32.xlu0 %v72, 16
    %v74 = vpop.permute.xlu0 %73
    %vm75 = vcmask 162944
    %76 = vst.msk [vmem:[#allocation0] sm:$0x1] %vm75, %v74
    %s77 = scalar_lea.vmem %s0, 3
    %v78 = vld [vmem:[%s77] sm:$0x1]
    %79 = vrot.lane.b32.xlu0 %v78, 12
    %v80 = vpop.permute.xlu0 %79
    %vm81 = vcmask 130144
    %82 = vst.msk [vmem:[#allocation0] sm:$0x1] %vm81, %v80
    %s83 = scalar_lea.vmem %s0, 2
    %v84 = vld [vmem:[%s83] sm:$0x1]
    %85 = vrot.lane.b32.xlu0 %v84, 8
    %v86 = vpop.permute.xlu0 %85
    %vm87 = vcmask 97344
    %88 = vst.msk [vmem:[#allocation0] sm:$0x1] %vm87, %v86
    %s89 = scalar_lea.vmem %s0, 1
    %v90 = vld [vmem:[%s89] sm:$0x1]
    %91 = vrot.lane.b32.xlu0 %v90, 4
    %v92 = vpop.permute.xlu0 %91
    %vm93 = vcmask 64544
    %94 = vst.msk [vmem:[#allocation0] sm:$0x1] %vm93, %v92
    %s96 = sshllo.u32 0, 1
    %v98 = vld [vmem:[#allocation0] sm:%s96]
    %s99 = sshllo.u32 0, 1
    %100 = vst [vmem:[%s1] sm:%s99] %v98

// kernel: tile.33
$region0: #{tile.33}
  #allocation0 [shape = 's32[1]{0}', space=sflag, size = 0x4, scoped, tag = 'scoped memory for tile.33']
  %s0 = inlined_call_operand.vmem [shape: f32[8], index: 0, kind: input, shape index: {}]
  %s1 = inlined_call_operand.vmem [shape: f32[16,8], index: 1, kind: output, shape index: {}]
  // Predicated region
  $region2: #{tile.33} parent=0 // pred_check
    _
  $region3: #{tile.33} parent=0 // pred_check_branch
    %3 = sbr.rel (0) target = $region5
  $region4: #{tile.33} parent=0 // pred_region
    _
  $region5: #{tile.33} parent=0 // pred_fallthru
    _
  %v4 = vld [vmem:[%s0] ss:$0 sm:$0xff]
  %5 = vst [vmem:[%s1] sm:$0xff] %v4
  %s6 = scalar_lea.vmem %s1, 8
  %7 = vst [vmem:[%s6] sm:$0xff] %v4

// kernel: tile.34
$region0: #{tile.34}
  %s0 = inlined_call_operand.vmem [shape: f32[16,8], index: 0, kind: input, shape index: {}]
  %s1 = inlined_call_operand.vmem [shape: f32[1,128], index: 1, kind: output, shape index: {}]
  $region1: #{tile.34} parent=0
    #allocation0 [shape = 'u8[4096]{0}', space=vmem, size = 0x1000, scoped, tag = 'scoped mem for output reshape']
    %v2 = vld [vmem:[%s0] sm:$0x1]
    %vm3 = vcmask 64512
    %4 = vst.msk [vmem:[#allocation0] sm:$0x1] %vm3, %v2
    %s5 = scalar_lea.vmem %s0, 15
    %v6 = vld [vmem:[%s5] sm:$0x1]
    %7 = vrot.lane.b32.xlu0 %v6, 120
    %v8 = vpop.permute.xlu0 %7
    %vm9 = vcmask 1048512
    %10 = vst.msk [vmem:[#allocation0] sm:$0x1] %vm9, %v8
    %s11 = scalar_lea.vmem %s0, 14
    %v12 = vld [vmem:[%s11] sm:$0x1]
    %13 = vrot.lane.b32.xlu0 %v12, 112
    %v14 = vpop.permute.xlu0 %13
    %vm15 = vcmask 982912
    %16 = vst.msk [vmem:[#allocation0] sm:$0x1] %vm15, %v14
    %s17 = scalar_lea.vmem %s0, 13
    %v18 = vld [vmem:[%s17] sm:$0x1]
    %19 = vrot.lane.b32.xlu0 %v18, 104
    %v20 = vpop.permute.xlu0 %19
    %vm21 = vcmask 917312
    %22 = vst.msk [vmem:[#allocation0] sm:$0x1] %vm21, %v20
    %s23 = scalar_lea.vmem %s0, 12
    %v24 = vld [vmem:[%s23] sm:$0x1]
    %25 = vrot.lane.b32.xlu0 %v24, 96
    %v26 = vpop.permute.xlu0 %25
    %vm27 = vcmask 851712
    %28 = vst.msk [vmem:[#allocation0] sm:$0x1] %vm27, %v26
    %s29 = scalar_lea.vmem %s0, 11
    %v30 = vld [vmem:[%s29] sm:$0x1]
    %31 = vrot.lane.b32.xlu0 %v30, 88
    %v32 = vpop.permute.xlu0 %31
    %vm33 = vcmask 786112
    %34 = vst.msk [vmem:[#allocation0] sm:$0x1] %vm33, %v32
    %s35 = scalar_lea.vmem %s0, 10
    %v36 = vld [vmem:[%s35] sm:$0x1]
    %37 = vrot.lane.b32.xlu0 %v36, 80
    %v38 = vpop.permute.xlu0 %37
    %vm39 = vcmask 720512
    %40 = vst.msk [vmem:[#allocation0] sm:$0x1] %vm39, %v38
    %s41 = scalar_lea.vmem %s0, 9
    %v42 = vld [vmem:[%s41] sm:$0x1]
    %43 = vrot.lane.b32.xlu0 %v42, 72
    %v44 = vpop.permute.xlu0 %43
    %vm45 = vcmask 654912
    %46 = vst.msk [vmem:[#allocation0] sm:$0x1] %vm45, %v44
    %s47 = scalar_lea.vmem %s0, 8
    %v48 = vld [vmem:[%s47] sm:$0x1]
    %49 = vrot.lane.b32.xlu0 %v48, 64
    %v50 = vpop.permute.xlu0 %49
    %vm51 = vcmask 589312
    %52 = vst.msk [vmem:[#allocation0] sm:$0x1] %vm51, %v50
    %s53 = scalar_lea.vmem %s0, 7
    %v54 = vld [vmem:[%s53] sm:$0x1]
    %55 = vrot.lane.b32.xlu0 %v54, 56
    %v56 = vpop.permute.xlu0 %55
    %vm57 = vcmask 523712
    %58 = vst.msk [vmem:[#allocation0] sm:$0x1] %vm57, %v56
    %s59 = scalar_lea.vmem %s0, 6
    %v60 = vld [vmem:[%s59] sm:$0x1]
    %61 = vrot.lane.b32.xlu0 %v60, 48
    %v62 = vpop.permute.xlu0 %61
    %vm63 = vcmask 458112
    %64 = vst.msk [vmem:[#allocation0] sm:$0x1] %vm63, %v62
    %s65 = scalar_lea.vmem %s0, 5
    %v66 = vld [vmem:[%s65] sm:$0x1]
    %67 = vrot.lane.b32.xlu0 %v66, 40
    %v68 = vpop.permute.xlu0 %67
    %vm69 = vcmask 392512
    %70 = vst.msk [vmem:[#allocation0] sm:$0x1] %vm69, %v68
    %s71 = scalar_lea.vmem %s0, 4
    %v72 = vld [vmem:[%s71] sm:$0x1]
    %73 = vrot.lane.b32.xlu0 %v72, 32
    %v74 = vpop.permute.xlu0 %73
    %vm75 = vcmask 326912
    %76 = vst.msk [vmem:[#allocation0] sm:$0x1] %vm75, %v74
    %s77 = scalar_lea.vmem %s0, 3
    %v78 = vld [vmem:[%s77] sm:$0x1]
    %79 = vrot.lane.b32.xlu0 %v78, 24
    %v80 = vpop.permute.xlu0 %79
    %vm81 = vcmask 261312
    %82 = vst.msk [vmem:[#allocation0] sm:$0x1] %vm81, %v80
    %s83 = scalar_lea.vmem %s0, 2
    %v84 = vld [vmem:[%s83] sm:$0x1]
    %85 = vrot.lane.b32.xlu0 %v84, 16
    %v86 = vpop.permute.xlu0 %85
    %vm87 = vcmask 195712
    %88 = vst.msk [vmem:[#allocation0] sm:$0x1] %vm87, %v86
    %s89 = scalar_lea.vmem %s0, 1
    %v90 = vld [vmem:[%s89] sm:$0x1]
    %91 = vrot.lane.b32.xlu0 %v90, 8
    %v92 = vpop.permute.xlu0 %91
    %vm93 = vcmask 130112
    %94 = vst.msk [vmem:[#allocation0] sm:$0x1] %vm93, %v92
    %s96 = sshllo.u32 0, 1
    %v98 = vld [vmem:[#allocation0] sm:%s96]
    %s99 = sshllo.u32 0, 1
    %100 = vst [vmem:[%s1] sm:%s99] %v98

// kernel: identity_residual_block_forward.1
$region0: #{identity_residual_block_forward.1}
  #allocation0 [shape = 'u32[]', space=smem, size = 0x4, offset = 0x4, fixed_abs, tag = 'smem constant byte address 0x4 - core index']
  #allocation1 [shape = 'u32[144,128]{1,0:T(1,128)}', space=vmem, size = 0x12000, scoped, tag = 'internal scratch']
  #allocation2 [shape = 'f32[18,64]{1,0:T(8,128)}', space=vmem, size = 0x3000, scoped, tag = 'scratch operand']
  #allocation3 [shape = 'f32[18,128]{1,0:T(8,128)}', space=vmem, size = 0x3000, scoped, tag = 'scratch operand']
  %s0 = inlined_call_operand.vmem [shape: f32[2,16,64], index: 0, kind: input, shape index: {}]
  %s1 = inlined_call_operand.vmem [shape: f32[1,64], index: 1, kind: input, shape index: {}]
  %s2 = inlined_call_operand.vmem [shape: f32[1,64], index: 2, kind: input, shape index: {}]
  %s3 = inlined_call_operand.vmem [shape: f32[192,256], index: 3, kind: input, shape index: {}]
  %s4 = inlined_call_operand.vmem [shape: f32[1,128], index: 4, kind: input, shape index: {}]
  %s5 = inlined_call_operand.vmem [shape: f32[1,128], index: 5, kind: input, shape index: {}]
  %s6 = inlined_call_operand.vmem [shape: f32[384,128], index: 6, kind: input, shape index: {}]
  %s7 = inlined_call_operand.vmem [shape: f32[2,16,128], index: 7, kind: output, shape index: {}]
  %s8 = sld [smem:[#allocation0]]
  $region61: #{identity_residual_block_forward.1} parent=0
    _
  %s10 = ssub.s32 1, %s8
  %s11 = scalar_select 0, %s10, %s8
  loop: start=0, step=1, limit=4
  $region2: #{identity_residual_block_forward.1} parent=0 // loop_pre_header
    _
  $region3: #{identity_residual_block_forward.1} parent=0 // loop_header
    %s13 = sphi 0, %s17
    %p14 = scmp.ge.s32.totalorder %s13, 4
    %s23 = sphi 0, %s25
    %s26 = sphi 0, %s23
    %s27 = sphi 0, %s26
    %s43 = sphi 0, %s27
    %s47 = sphi 0, %s47
    %s49 = sphi 0, %s47
    %s50 = sphi 0, %s49
    %s64 = sphi 0, %s50
    %s68 = sphi 0, %s68
    %s70 = sphi 0, %s68
    %s71 = sphi 0, %s70
    %s85 = sphi 0, %s71
    %s89 = sphi 0, %s89
    %s91 = sphi 0, %s89
    %s92 = sphi 0, %s91
    %s106 = sphi 0, %s92
    %s110 = sphi 0, %s110
    %s112 = sphi 0, %s110
    %s113 = sphi 0, %s112
    %s127 = sphi 0, %s113
    %s131 = sphi 0, %s131
    %s133 = sphi 0, %s131
    %s134 = sphi 0, %s133
    %s148 = sphi 0, %s134
    %s152 = sphi 0, %s152
    %s154 = sphi 0, %s152
    %s155 = sphi 0, %s154
    %s169 = sphi 0, %s155
    %s175 = sphi 0, %s177
    %s178 = sphi 0, %s175
    %s179 = sphi 0, %s178
    %s195 = sphi 0, %s179
  $region4: #{identity_residual_block_forward.1} parent=0 // loop_header_branch
    %16 = sbr.rel (%p14) target = $region8
  $region5: #{identity_residual_block_forward.1} parent=0 // loop_body
    %s18 = ssub.s32 %s13, 1
    %s19 = ssub.s32 %s13, 2
    %s20 = sadd.s32 %s13, 1
    %s21 = ssub.s32 %s13, %s20
    %p22 = scmp.eq.s32.totalorder %s21, 0
    %s24 = sadd.s32 %s23, 1
    %s25 = scalar_select %p22, %s23, %s24
    %p28 = pneg %p22
    %p29 = scmp.eq.s32.totalorder %s13, 1
    %p30 = por %p28, %p29
    %p31 = scmp.ne.s32.totalorder %s23, %s26
    %p32 = scmp.eq.s32.totalorder %s13, 0
    %p33 = por %p31, %p32
    %p34 = scmp.ne.s32.totalorder %s23, %s26
    %p35 = scmp.eq.s32.totalorder %s18, 1
    %p36 = por %p34, %p35
    %p37 = scmp.ne.s32.totalorder %s26, %s27
    %p38 = scmp.eq.s32.totalorder %s18, 0
    %p39 = por %p37, %p38
    %p40 = scmp.ne.s32.totalorder %s26, %s27
    %p41 = scmp.eq.s32.totalorder %s19, 1
    %p42 = por %p40, %p41
    %p44 = scmp.ne.s32.totalorder %s27, %s43
    %p45 = scmp.eq.s32.totalorder %s19, 0
    %p46 = por %p44, %p45
    %s48 = sadd.s32 %s47, 1
    %p51 = scmp.eq.s32.totalorder %s13, 1
    %p52 = scmp.ne.s32.totalorder %s47, %s49
    %p53 = scmp.eq.s32.totalorder %s13, 0
    %p54 = por %p52, %p53
    %p55 = scmp.ne.s32.totalorder %s47, %s49
    %p56 = scmp.eq.s32.totalorder %s18, 1
    %p57 = por %p55, %p56
    %p58 = scmp.ne.s32.totalorder %s49, %s50
    %p59 = scmp.eq.s32.totalorder %s18, 0
    %p60 = por %p58, %p59
    %p61 = scmp.ne.s32.totalorder %s49, %s50
    %p62 = scmp.eq.s32.totalorder %s19, 1
    %p63 = por %p61, %p62
    %p65 = scmp.ne.s32.totalorder %s50, %s64
    %p66 = scmp.eq.s32.totalorder %s19, 0
    %p67 = por %p65, %p66
    %s69 = sadd.s32 %s68, 1
    %p72 = scmp.eq.s32.totalorder %s13, 1
    %p73 = scmp.ne.s32.totalorder %s68, %s70
    %p74 = scmp.eq.s32.totalorder %s13, 0
    %p75 = por %p73, %p74
    %p76 = scmp.ne.s32.totalorder %s68, %s70
    %p77 = scmp.eq.s32.totalorder %s18, 1
    %p78 = por %p76, %p77
    %p79 = scmp.ne.s32.totalorder %s70, %s71
    %p80 = scmp.eq.s32.totalorder %s18, 0
    %p81 = por %p79, %p80
    %p82 = scmp.ne.s32.totalorder %s70, %s71
    %p83 = scmp.eq.s32.totalorder %s19, 1
    %p84 = por %p82, %p83
    %p86 = scmp.ne.s32.totalorder %s71, %s85
    %p87 = scmp.eq.s32.totalorder %s19, 0
    %p88 = por %p86, %p87
    %s90 = sadd.s32 %s89, 1
    %p93 = scmp.eq.s32.totalorder %s13, 1
    %p94 = scmp.ne.s32.totalorder %s89, %s91
    %p95 = scmp.eq.s32.totalorder %s13, 0
    %p96 = por %p94, %p95
    %p97 = scmp.ne.s32.totalorder %s89, %s91
    %p98 = scmp.eq.s32.totalorder %s18, 1
    %p99 = por %p97, %p98
    %p100 = scmp.ne.s32.totalorder %s91, %s92
    %p101 = scmp.eq.s32.totalorder %s18, 0
    %p102 = por %p100, %p101
    %p103 = scmp.ne.s32.totalorder %s91, %s92
    %p104 = scmp.eq.s32.totalorder %s19, 1
    %p105 = por %p103, %p104
    %p107 = scmp.ne.s32.totalorder %s92, %s106
    %p108 = scmp.eq.s32.totalorder %s19, 0
    %p109 = por %p107, %p108
    %s111 = sadd.s32 %s110, 1
    %p114 = scmp.eq.s32.totalorder %s13, 1
    %p115 = scmp.ne.s32.totalorder %s110, %s112
    %p116 = scmp.eq.s32.totalorder %s13, 0
    %p117 = por %p115, %p116
    %p118 = scmp.ne.s32.totalorder %s110, %s112
    %p119 = scmp.eq.s32.totalorder %s18, 1
    %p120 = por %p118, %p119
    %p121 = scmp.ne.s32.totalorder %s112, %s113
    %p122 = scmp.eq.s32.totalorder %s18, 0
    %p123 = por %p121, %p122
    %p124 = scmp.ne.s32.totalorder %s112, %s113
    %p125 = scmp.eq.s32.totalorder %s19, 1
    %p126 = por %p124, %p125
    %p128 = scmp.ne.s32.totalorder %s113, %s127
    %p129 = scmp.eq.s32.totalorder %s19, 0
    %p130 = por %p128, %p129
    %s132 = sadd.s32 %s131, 1
    %p135 = scmp.eq.s32.totalorder %s13, 1
    %p136 = scmp.ne.s32.totalorder %s131, %s133
    %p137 = scmp.eq.s32.totalorder %s13, 0
    %p138 = por %p136, %p137
    %p139 = scmp.ne.s32.totalorder %s131, %s133
    %p140 = scmp.eq.s32.totalorder %s18, 1
    %p141 = por %p139, %p140
    %p142 = scmp.ne.s32.totalorder %s133, %s134
    %p143 = scmp.eq.s32.totalorder %s18, 0
    %p144 = por %p142, %p143
    %p145 = scmp.ne.s32.totalorder %s133, %s134
    %p146 = scmp.eq.s32.totalorder %s19, 1
    %p147 = por %p145, %p146
    %p149 = scmp.ne.s32.totalorder %s134, %s148
    %p150 = scmp.eq.s32.totalorder %s19, 0
    %p151 = por %p149, %p150
    %s153 = sadd.s32 %s152, 1
    %p156 = scmp.eq.s32.totalorder %s13, 1
    %p157 = scmp.ne.s32.totalorder %s152, %s154
    %p158 = scmp.eq.s32.totalorder %s13, 0
    %p159 = por %p157, %p158
    %p160 = scmp.ne.s32.totalorder %s152, %s154
    %p161 = scmp.eq.s32.totalorder %s18, 1
    %p162 = por %p160, %p161
    %p163 = scmp.ne.s32.totalorder %s154, %s155
    %p164 = scmp.eq.s32.totalorder %s18, 0
    %p165 = por %p163, %p164
    %p166 = scmp.ne.s32.totalorder %s154, %s155
    %p167 = scmp.eq.s32.totalorder %s19, 1
    %p168 = por %p166, %p167
    %p170 = scmp.ne.s32.totalorder %s155, %s169
    %p171 = scmp.eq.s32.totalorder %s19, 0
    %p172 = por %p170, %p171
    %s173 = ssub.s32 %s13, %s20
    %p174 = scmp.eq.s32.totalorder %s173, 0
    %s176 = sadd.s32 %s175, 1
    %s177 = scalar_select %p174, %s175, %s176
    %p180 = pneg %p174
    %p181 = scmp.eq.s32.totalorder %s13, 1
    %p182 = por %p180, %p181
    %p183 = scmp.ne.s32.totalorder %s175, %s178
    %p184 = scmp.eq.s32.totalorder %s13, 0
    %p185 = por %p183, %p184
    %p186 = scmp.ne.s32.totalorder %s175, %s178
    %p187 = scmp.eq.s32.totalorder %s18, 1
    %p188 = por %p186, %p187
    %p189 = scmp.ne.s32.totalorder %s178, %s179
    %p190 = scmp.eq.s32.totalorder %s18, 0
    %p191 = por %p189, %p190
    %p192 = scmp.ne.s32.totalorder %s178, %s179
    %p193 = scmp.eq.s32.totalorder %s19, 1
    %p194 = por %p192, %p193
    %p196 = scmp.ne.s32.totalorder %s179, %s195
    %p197 = scmp.eq.s32.totalorder %s19, 0
    %p198 = por %p196, %p197
    %p199 = scmp.le.s32.totalorder 1, %s13
    %p200 = scmp.lt.s32.totalorder %s13, 3
    %p201 = pnand %p199, %p200
    %p202 = pneg %p201
    // Predicated region
    $region9: #{identity_residual_block_forward.1} parent=5 // pred_check
      _
    $region10: #{identity_residual_block_forward.1} parent=5 // pred_check_branch
      %204 = sbr.rel (%p201) target = $region12
    $region11: #{identity_residual_block_forward.1} parent=5 // pred_region
      %s205 = ssub.s32 %s13, 1
      // Predicated region
      $region13: #{identity_residual_block_forward.1} parent=11 // pred_check
        %p206 = pneg %p60
      $region14: #{identity_residual_block_forward.1} parent=11 // pred_check_branch
        %208 = sbr.rel (%p206) target = $region16
      $region15: #{identity_residual_block_forward.1} parent=11 // pred_region
        _
      $region16: #{identity_residual_block_forward.1} parent=11 // pred_fallthru
        _
      // Predicated region
      $region17: #{identity_residual_block_forward.1} parent=11 // pred_check
        %p209 = pneg %p81
      $region18: #{identity_residual_block_forward.1} parent=11 // pred_check_branch
        %211 = sbr.rel (%p209) target = $region20
      $region19: #{identity_residual_block_forward.1} parent=11 // pred_region
        _
      $region20: #{identity_residual_block_forward.1} parent=11 // pred_fallthru
        _
      // Predicated region
      $region21: #{identity_residual_block_forward.1} parent=11 // pred_check
        %p212 = pneg %p102
      $region22: #{identity_residual_block_forward.1} parent=11 // pred_check_branch
        %214 = sbr.rel (%p212) target = $region24
      $region23: #{identity_residual_block_forward.1} parent=11 // pred_region
        _
      $region24: #{identity_residual_block_forward.1} parent=11 // pred_fallthru
        _
      // Predicated region
      $region25: #{identity_residual_block_forward.1} parent=11 // pred_check
        %p215 = pneg %p123
      $region26: #{identity_residual_block_forward.1} parent=11 // pred_check_branch
        %217 = sbr.rel (%p215) target = $region28
      $region27: #{identity_residual_block_forward.1} parent=11 // pred_region
        _
      $region28: #{identity_residual_block_forward.1} parent=11 // pred_fallthru
        _
      // Predicated region
      $region29: #{identity_residual_block_forward.1} parent=11 // pred_check
        %p218 = pneg %p144
      $region30: #{identity_residual_block_forward.1} parent=11 // pred_check_branch
        %220 = sbr.rel (%p218) target = $region32
      $region31: #{identity_residual_block_forward.1} parent=11 // pred_region
        _
      $region32: #{identity_residual_block_forward.1} parent=11 // pred_fallthru
        _
      // Predicated region
      $region33: #{identity_residual_block_forward.1} parent=11 // pred_check
        %p221 = pneg %p165
      $region34: #{identity_residual_block_forward.1} parent=11 // pred_check_branch
        %223 = sbr.rel (%p221) target = $region36
      $region35: #{identity_residual_block_forward.1} parent=11 // pred_region
        _
      $region36: #{identity_residual_block_forward.1} parent=11 // pred_fallthru
        _
    $region12: #{identity_residual_block_forward.1} parent=5 // pred_fallthru
      _
    %p224 = scmp.lt.s32.totalorder %s13, 2
    // Predicated region
    $region37: #{identity_residual_block_forward.1} parent=5 // pred_check
      %p225 = pneg %p224
    $region38: #{identity_residual_block_forward.1} parent=5 // pred_check_branch
      %227 = sbr.rel (%p225) target = $region40
    $region39: #{identity_residual_block_forward.1} parent=5 // pred_region
      // Predicated region
      $region41: #{identity_residual_block_forward.1} parent=39 // pred_check
        %p228 = pneg %p33
      $region42: #{identity_residual_block_forward.1} parent=39 // pred_check_branch
        %230 = sbr.rel (%p228) target = $region44
      $region43: #{identity_residual_block_forward.1} parent=39 // pred_region
        %p231 = scmp.lt.s32.totalorder %s13, 1
        %s232 = scalar_select %p231, %s13, 1
        %s233 = smul.addr %s232, 2
        %s234 = smul.addr %s233, 8
        %s235 = scalar_lea.vmem %s0, %s234
      $region44: #{identity_residual_block_forward.1} parent=39 // pred_fallthru
        _
    $region40: #{identity_residual_block_forward.1} parent=5 // pred_fallthru
      _
    %p236 = scmp.le.s32.totalorder 1, %s13
    %p237 = scmp.lt.s32.totalorder %s13, 3
    %p238 = pnand %p236, %p237
    %p239 = pneg %p238
    // Predicated region
    $region45: #{identity_residual_block_forward.1} parent=5 // pred_check
      _
    $region46: #{identity_residual_block_forward.1} parent=5 // pred_check_branch
      %241 = sbr.rel (%p238) target = $region48
    $region47: #{identity_residual_block_forward.1} parent=5 // pred_region
      %s242 = ssub.s32 %s13, 1
      %p243 = scmp.lt.s32.totalorder %s18, 1
      %s244 = scalar_select %p243, %s18, 1
      %s245 = smul.addr %s244, 2
      %s246 = smul.addr %s245, 8
      %s247 = scalar_lea.vmem %s0, %s246
      %p248 = pneg %p39
      %p249 = pneg %p36
      %p250 = pneg %p60
      %p251 = pneg %p57
      %p252 = pneg %p81
      %p253 = pneg %p78
      %p254 = pneg %p102
      %p255 = pneg %p99
      %p256 = pneg %p123
      %p257 = pneg %p120
      %p258 = pneg %p144
      %p259 = pneg %p141
      %p260 = pneg %p165
      %p261 = pneg %p162
      %p262 = pneg %p191
      %p263 = pneg %p188
      %p264 = scmp.lt.s32.totalorder %s18, 1
      %s265 = scalar_select %p264, %s18, 1
      %s266 = smul.addr %s265, 2
      %s267 = smul.addr %s266, 8
      %s268 = scalar_lea.vmem %s7, %s267
      %p269 = scmp.lt.s32.totalorder %s18, 1
      %s270 = scalar_select %p269, %s18, 1
      %s271 = smul.addr %s270, 2
      %s272 = smul.addr %s271, 8
      %s273 = scalar_lea.vmem %s0, %s272
      %p274 = scmp.lt.s32.totalorder %s18, 1
      %s275 = scalar_select %p274, %s18, 1
      %s276 = smul.addr %s275, 2
      %s277 = smul.addr %s276, 8
      %s278 = scalar_lea.vmem %s7, %s277
      %v279 = vld [vmem:[%s273] sm:$0xff]
      %v280 = vld [vmem:[%s273 + $0x8] sm:$0xff]
      %v281 = vld [vmem:[%s1] sm:$0x1]
      %v283 = vlaneseq
      %v284 = vshrl.u32 %v283, 7
      %v285 = vsub.s32 0, %v284
      %v286 = vrot.slane %v281, %v285
      %v288 = vmul.f32 %v279, %v286
      %v289 = vmul.f32 %v280, %v286
      %v290 = vld [vmem:[%s2] sm:$0x1]
      %v292 = vlaneseq
      %v293 = vshrl.u32 %v292, 7
      %v294 = vsub.s32 0, %v293
      %v295 = vrot.slane %v290, %v294
      %v297 = vadd.f32 %v288, %v295
      %v298 = vadd.f32 %v289, %v295
      %v299 = vmax.f32 %v297, 0.0
      %v300 = vmax.f32 %v298, 0.0
      %vm301 = vcmask 516096
      %302 = vst.msk [vmem:[#allocation2] sm:$0x1] %vm301, 0.0
      %303 = vst.msk [vmem:[#allocation2 + $0x11] sm:$0x1] %vm301, 0.0
      %vm304 = vcmask 523264
      %305 = vst.msk [vmem:[#allocation2 + $0x1] sm:$0xff] %vm304, %v299
      %306 = vst.msk [vmem:[#allocation2 + $0x9] sm:$0xff] %vm304, %v300
      %v307 = vld [vmem:[#allocation2] sm:$0xff]
      %v308 = vld [vmem:[#allocation2 + $0x8] sm:$0xff]
      %v309 = vld [vmem:[#allocation2 + $0x1] sm:$0xff]
      %v310 = vld [vmem:[#allocation2 + $0x9] sm:$0xff]
      %v311 = vld [vmem:[#allocation2 + $0x2] sm:$0xff]
      %v312 = vld [vmem:[#allocation2 + $0xa] sm:$0xff]
      %315 = vrot.lane.b32.xlu0 %v309, 64
      %v316 = vpop.permute.xlu0 %315
      %317 = vrot.lane.b32.xlu0 %v310, 64
      %v318 = vpop.permute.xlu0 %317
      %v321 = vsel %vm304, %v307, %v316
      %v322 = vsel %vm304, %v308, %v318
      %v323 = vld [vmem:[%s3] sm:$0xff]
      %v324 = vld [vmem:[%s3 + $0x8] sm:$0xff]
      %v325 = vld [vmem:[%s3 + $0x10] sm:$0xff]
      %v326 = vld [vmem:[%s3 + $0x18] sm:$0xff]
      %v327 = vld [vmem:[%s3 + $0x20] sm:$0xff]
      %v328 = vld [vmem:[%s3 + $0x28] sm:$0xff]
      %v329 = vld [vmem:[%s3 + $0x30] sm:$0xff]
      %v330 = vld [vmem:[%s3 + $0x38] sm:$0xff]
      %v331 = vld [vmem:[%s3 + $0x40] sm:$0xff]
      %v332 = vld [vmem:[%s3 + $0x48] sm:$0xff]
      %v333 = vld [vmem:[%s3 + $0x50] sm:$0xff]
      %v334 = vld [vmem:[%s3 + $0x58] sm:$0xff]
      %v335 = vld [vmem:[%s3 + $0x60] sm:$0xff]
      %v336 = vld [vmem:[%s3 + $0x68] sm:$0xff]
      %v337 = vld [vmem:[%s3 + $0x70] sm:$0xff]
      %v338 = vld [vmem:[%s3 + $0x78] sm:$0xff]
      %v339 = vld [vmem:[%s3 + $0x80] sm:$0xff]
      %v340 = vld [vmem:[%s3 + $0x88] sm:$0xff]
      %v341 = vld [vmem:[%s3 + $0x90] sm:$0xff]
      %v342 = vld [vmem:[%s3 + $0x98] sm:$0xff]
      %v343 = vld [vmem:[%s3 + $0xa0] sm:$0xff]
      %v344 = vld [vmem:[%s3 + $0xa8] sm:$0xff]
      %v345 = vld [vmem:[%s3 + $0xb0] sm:$0xff]
      %v346 = vld [vmem:[%s3 + $0xb8] sm:$0xff]
      %v347 = vld [vmem:[%s3 + $0xc0] sm:$0xff]
      %v348 = vld [vmem:[%s3 + $0xc8] sm:$0xff]
      %v349 = vld [vmem:[%s3 + $0xd0] sm:$0xff]
      %v350 = vld [vmem:[%s3 + $0xd8] sm:$0xff]
      %v351 = vld [vmem:[%s3 + $0xe0] sm:$0xff]
      %v352 = vld [vmem:[%s3 + $0xe8] sm:$0xff]
      %v353 = vld [vmem:[%s3 + $0xf0] sm:$0xff]
      %v354 = vld [vmem:[%s3 + $0xf8] sm:$0xff]
      %v355 = vld [vmem:[%s3 + $0x100] sm:$0xff]
      %v356 = vld [vmem:[%s3 + $0x108] sm:$0xff]
      %v357 = vld [vmem:[%s3 + $0x110] sm:$0xff]
      %v358 = vld [vmem:[%s3 + $0x118] sm:$0xff]
      %v359 = vld [vmem:[%s3 + $0x120] sm:$0xff]
      %v360 = vld [vmem:[%s3 + $0x128] sm:$0xff]
      %v361 = vld [vmem:[%s3 + $0x130] sm:$0xff]
      %v362 = vld [vmem:[%s3 + $0x138] sm:$0xff]
      %v363 = vld [vmem:[%s3 + $0x140] sm:$0xff]
      %v364 = vld [vmem:[%s3 + $0x148] sm:$0xff]
      %v365 = vld [vmem:[%s3 + $0x150] sm:$0xff]
      %v366 = vld [vmem:[%s3 + $0x158] sm:$0xff]
      %v367 = vld [vmem:[%s3 + $0x160] sm:$0xff]
      %v368 = vld [vmem:[%s3 + $0x168] sm:$0xff]
      %v369 = vld [vmem:[%s3 + $0x170] sm:$0xff]
      %v370 = vld [vmem:[%s3 + $0x178] sm:$0xff]
      %v372 = vsel %vm304, %v311, 0
      %v375 = vsel %vm304, %v312, 0
      %377 = vmatprep.subr.mxu0 %v324
      %378 = vmatpush1.msra.mxu0 %v323
      %379 = vmatprep.subr.mxu0 %v326
      %380 = vmatpush1.msra.mxu0 %v325
      %381 = vmatprep.subr.mxu0 %v328
      %382 = vmatpush1.msra.mxu0 %v327
      %383 = vmatprep.subr.mxu0 %v330
      %384 = vmatpush1.msra.mxu0 %v329
      %385 = vmatprep.subr.mxu0 %v332
      %386 = vmatpush1.msra.mxu0 %v331
      %387 = vmatprep.subr.mxu0 %v334
      %388 = vmatpush1.msra.mxu0 %v333
      %389 = vmatprep.subr.mxu0 %v336
      %390 = vmatpush1.msra.mxu0 %v335
      %391 = vmatprep.subr.mxu0 %v338
      %392 = vmatpush1.msra.mxu0 %v337
      %393 = vmatprep.subr.mxu0 %v340
      %394 = vmatpush1.msra.mxu0 %v339
      %395 = vmatprep.subr.mxu0 %v342
      %396 = vmatpush1.msra.mxu0 %v341
      %397 = vmatprep.subr.mxu0 %v344
      %398 = vmatpush1.msra.mxu0 %v343
      %399 = vmatprep.subr.mxu0 %v346
      %400 = vmatpush1.msra.mxu0 %v345
      %401 = vmatprep.subr.mxu0 %v348
      %402 = vmatpush1.msra.mxu0 %v347
      %403 = vmatprep.subr.mxu0 %v350
      %404 = vmatpush1.msra.mxu0 %v349
      %405 = vmatprep.subr.mxu0 %v352
      %406 = vmatpush1.msra.mxu0 %v351
      %407 = vmatprep.subr.mxu0 %v354
      %408 = vmatpush1.msra.mxu0 %v353
      %409 = vmatprep.subr.mxu0 %v356
      %410 = vmatpush1.msra.mxu0 %v355
      %411 = vmatprep.subr.mxu0 %v358
      %412 = vmatpush1.msra.mxu0 %v357
      %413 = vmatprep.subr.mxu0 %v360
      %414 = vmatpush1.msra.mxu0 %v359
      %415 = vmatprep.subr.mxu0 %v362
      %416 = vmatpush1.msra.mxu0 %v361
      %417 = vmatprep.subr.mxu0 %v364
      %418 = vmatpush1.msra.mxu0 %v363
      %419 = vmatprep.subr.mxu0 %v366
      %420 = vmatpush1.msra.mxu0 %v365
      %421 = vmatprep.subr.mxu0 %v368
      %422 = vmatpush1.msra.mxu0 %v367
      %423 = vmatprep.subr.mxu0 %v370
      %424 = vmatpush1.msra.mxu0 %v369
      %425 = vmatprep.subr.mxu0 0.0
      %426 = vmatpush1.msra.mxu0 0.0
      %427 = vmatprep.subr.mxu0 0.0
      %428 = vmatpush1.msra.mxu0 0.0
      %429 = vmatprep.subr.mxu0 0.0
      %430 = vmatpush1.msra.mxu0 0.0
      %431 = vmatprep.subr.mxu0 0.0
      %432 = vmatpush1.msra.mxu0 0.0
      %433 = vmatprep.subr.mxu0 0.0
      %434 = vmatpush1.msra.mxu0 0.0
      %435 = vmatprep.subr.mxu0 0.0
      %436 = vmatpush1.msra.mxu0 0.0
      %437 = vmatprep.subr.mxu0 0.0
      %438 = vmatpush1.msra.mxu0 0.0
      %439 = vmatprep.subr.mxu0 0.0
      %440 = vmatpush1.msra.mxu0 0.0
      %441 = vmatprep.mubr.f32.mxu0 %v372
      %442 = vmatmul.mubr.f32.gmra.mrb[0].mxu0 %v321
      %v443 = vpop.f32.mrb[0].mxu0
      %v444 = vadd.f32 0.0, %v443
      %v445 = vpop.f32.mrb[0].mxu0
      %v446 = vadd.f32 0.0, %v445
      %447 = vmatprep.mubr.f32.mxu0 %v375
      %448 = vmatmul.mubr.f32.gmra.mrb[0].mxu0 %v322
      %v449 = vpop.f32.mrb[0].mxu0
      %v450 = vadd.f32 0.0, %v449
      %v451 = vpop.f32.mrb[0].mxu0
      %v452 = vadd.f32 0.0, %v451
      %453 = vdwg.mxu0
      %v454 = vld [vmem:[%s4] sm:$0x1]
      %v456 = vlaneseq
      %v457 = vshrl.u32 %v456, 7
      %v458 = vsub.s32 0, %v457
      %v459 = vrot.slane %v454, %v458
      %v461 = vmul.f32 %v444, %v459
      %v462 = vmul.f32 %v450, %v459
      %v463 = vld [vmem:[%s5] sm:$0x1]
      %v465 = vlaneseq
      %v466 = vshrl.u32 %v465, 7
      %v467 = vsub.s32 0, %v466
      %v468 = vrot.slane %v463, %v467
      %v470 = vadd.f32 %v461, %v468
      %v471 = vadd.f32 %v462, %v468
      %v472 = vmax.f32 %v470, 0.0
      %v473 = vmax.f32 %v471, 0.0
      %474 = vst [vmem:[#allocation3] sm:$0x1] 0.0
      %475 = vst [vmem:[#allocation3 + $0x11] sm:$0x1] 0.0
      %476 = vst [vmem:[#allocation3 + $0x1] sm:$0xff] %v472
      %477 = vst [vmem:[#allocation3 + $0x9] sm:$0xff] %v473
      %v478 = vld [vmem:[#allocation3] sm:$0xff]
      %v479 = vld [vmem:[#allocation3 + $0x8] sm:$0xff]
      %v480 = vld [vmem:[#allocation3 + $0x1] sm:$0xff]
      %v481 = vld [vmem:[#allocation3 + $0x9] sm:$0xff]
      %v482 = vld [vmem:[#allocation3 + $0x2] sm:$0xff]
      %v483 = vld [vmem:[#allocation3 + $0xa] sm:$0xff]
      %v484 = vld [vmem:[%s6] sm:$0xff]
      %v485 = vld [vmem:[%s6 + $0x8] sm:$0xff]
      %v486 = vld [vmem:[%s6 + $0x10] sm:$0xff]
      %v487 = vld [vmem:[%s6 + $0x18] sm:$0xff]
      %v488 = vld [vmem:[%s6 + $0x20] sm:$0xff]
      %v489 = vld [vmem:[%s6 + $0x28] sm:$0xff]
      %v490 = vld [vmem:[%s6 + $0x30] sm:$0xff]
      %v491 = vld [vmem:[%s6 + $0x38] sm:$0xff]
      %v492 = vld [vmem:[%s6 + $0x40] sm:$0xff]
      %v493 = vld [vmem:[%s6 + $0x48] sm:$0xff]
      %v494 = vld [vmem:[%s6 + $0x50] sm:$0xff]
      %v495 = vld [vmem:[%s6 + $0x58] sm:$0xff]
      %v496 = vld [vmem:[%s6 + $0x60] sm:$0xff]
      %v497 = vld [vmem:[%s6 + $0x68] sm:$0xff]
      %v498 = vld [vmem:[%s6 + $0x70] sm:$0xff]
      %v499 = vld [vmem:[%s6 + $0x78] sm:$0xff]
      %v500 = vld [vmem:[%s6 + $0x80] sm:$0xff]
      %v501 = vld [vmem:[%s6 + $0x88] sm:$0xff]
      %v502 = vld [vmem:[%s6 + $0x90] sm:$0xff]
      %v503 = vld [vmem:[%s6 + $0x98] sm:$0xff]
      %v504 = vld [vmem:[%s6 + $0xa0] sm:$0xff]
      %v505 = vld [vmem:[%s6 + $0xa8] sm:$0xff]
      %v506 = vld [vmem:[%s6 + $0xb0] sm:$0xff]
      %v507 = vld [vmem:[%s6 + $0xb8] sm:$0xff]
      %v508 = vld [vmem:[%s6 + $0xc0] sm:$0xff]
      %v509 = vld [vmem:[%s6 + $0xc8] sm:$0xff]
      %v510 = vld [vmem:[%s6 + $0xd0] sm:$0xff]
      %v511 = vld [vmem:[%s6 + $0xd8] sm:$0xff]
      %v512 = vld [vmem:[%s6 + $0xe0] sm:$0xff]
      %v513 = vld [vmem:[%s6 + $0xe8] sm:$0xff]
      %v514 = vld [vmem:[%s6 + $0xf0] sm:$0xff]
      %v515 = vld [vmem:[%s6 + $0xf8] sm:$0xff]
      %v516 = vld [vmem:[%s6 + $0x100] sm:$0xff]
      %v517 = vld [vmem:[%s6 + $0x108] sm:$0xff]
      %v518 = vld [vmem:[%s6 + $0x110] sm:$0xff]
      %v519 = vld [vmem:[%s6 + $0x118] sm:$0xff]
      %v520 = vld [vmem:[%s6 + $0x120] sm:$0xff]
      %v521 = vld [vmem:[%s6 + $0x128] sm:$0xff]
      %v522 = vld [vmem:[%s6 + $0x130] sm:$0xff]
      %v523 = vld [vmem:[%s6 + $0x138] sm:$0xff]
      %v524 = vld [vmem:[%s6 + $0x140] sm:$0xff]
      %v525 = vld [vmem:[%s6 + $0x148] sm:$0xff]
      %v526 = vld [vmem:[%s6 + $0x150] sm:$0xff]
      %v527 = vld [vmem:[%s6 + $0x158] sm:$0xff]
      %v528 = vld [vmem:[%s6 + $0x160] sm:$0xff]
      %v529 = vld [vmem:[%s6 + $0x168] sm:$0xff]
      %v530 = vld [vmem:[%s6 + $0x170] sm:$0xff]
      %v531 = vld [vmem:[%s6 + $0x178] sm:$0xff]
      %532 = vmatprep.subr.mxu0 0.0
      %533 = vmatpush1.msra.mxu0 %v484
      %534 = vmatprep.subr.mxu0 0.0
      %535 = vmatpush1.msra.mxu0 %v485
      %536 = vmatprep.subr.mxu0 0.0
      %537 = vmatpush1.msra.mxu0 %v486
      %538 = vmatprep.subr.mxu0 0.0
      %539 = vmatpush1.msra.mxu0 %v487
      %540 = vmatprep.subr.mxu0 0.0
      %541 = vmatpush1.msra.mxu0 %v488
      %542 = vmatprep.subr.mxu0 0.0
      %543 = vmatpush1.msra.mxu0 %v489
      %544 = vmatprep.subr.mxu0 0.0
      %545 = vmatpush1.msra.mxu0 %v490
      %546 = vmatprep.subr.mxu0 0.0
      %547 = vmatpush1.msra.mxu0 %v491
      %548 = vmatprep.subr.mxu0 0.0
      %549 = vmatpush1.msra.mxu0 %v492
      %550 = vmatprep.subr.mxu0 0.0
      %551 = vmatpush1.msra.mxu0 %v493
      %552 = vmatprep.subr.mxu0 0.0
      %553 = vmatpush1.msra.mxu0 %v494
      %554 = vmatprep.subr.mxu0 0.0
      %555 = vmatpush1.msra.mxu0 %v495
      %556 = vmatprep.subr.mxu0 0.0
      %557 = vmatpush1.msra.mxu0 %v496
      %558 = vmatprep.subr.mxu0 0.0
      %559 = vmatpush1.msra.mxu0 %v497
      %560 = vmatprep.subr.mxu0 0.0
      %561 = vmatpush1.msra.mxu0 %v498
      %562 = vmatprep.subr.mxu0 0.0
      %563 = vmatpush1.msra.mxu0 %v499
      %564 = vmatprep.subr.mxu0 0.0
      %565 = vmatpush1.msra.mxu0 %v500
      %566 = vmatprep.subr.mxu0 0.0
      %567 = vmatpush1.msra.mxu0 %v501
      %568 = vmatprep.subr.mxu0 0.0
      %569 = vmatpush1.msra.mxu0 %v502
      %570 = vmatprep.subr.mxu0 0.0
      %571 = vmatpush1.msra.mxu0 %v503
      %572 = vmatprep.subr.mxu0 0.0
      %573 = vmatpush1.msra.mxu0 %v504
      %574 = vmatprep.subr.mxu0 0.0
      %575 = vmatpush1.msra.mxu0 %v505
      %576 = vmatprep.subr.mxu0 0.0
      %577 = vmatpush1.msra.mxu0 %v506
      %578 = vmatprep.subr.mxu0 0.0
      %579 = vmatpush1.msra.mxu0 %v507
      %580 = vmatprep.subr.mxu0 0.0
      %581 = vmatpush1.msra.mxu0 %v508
      %582 = vmatprep.subr.mxu0 0.0
      %583 = vmatpush1.msra.mxu0 %v509
      %584 = vmatprep.subr.mxu0 0.0
      %585 = vmatpush1.msra.mxu0 %v510
      %586 = vmatprep.subr.mxu0 0.0
      %587 = vmatpush1.msra.mxu0 %v511
      %588 = vmatprep.subr.mxu0 0.0
      %589 = vmatpush1.msra.mxu0 %v512
      %590 = vmatprep.subr.mxu0 0.0
      %591 = vmatpush1.msra.mxu0 %v513
      %592 = vmatprep.subr.mxu0 0.0
      %593 = vmatpush1.msra.mxu0 %v514
      %594 = vmatprep.subr.mxu0 0.0
      %595 = vmatpush1.msra.mxu0 %v515
      %596 = vmatprep.mubr.f32.mxu0 %v480
      %597 = vmatmul.mubr.f32.gmra.mrb[0].mxu0 %v478
      %v598 = vpop.f32.mrb[0].mxu0
      %v599 = vadd.f32 0.0, %v598
      %v600 = vpop.f32.mrb[0].mxu0
      %601 = vmatprep.mubr.f32.mxu0 %v481
      %602 = vmatmul.mubr.f32.gmra.mrb[0].mxu0 %v479
      %v603 = vpop.f32.mrb[0].mxu0
      %v604 = vadd.f32 0.0, %v603
      %v605 = vpop.f32.mrb[0].mxu0
      %606 = vdwg.mxu0
      %607 = vmatprep.subr.mxu0 0.0
      %608 = vmatpush1.msra.mxu0 %v516
      %609 = vmatprep.subr.mxu0 0.0
      %610 = vmatpush1.msra.mxu0 %v517
      %611 = vmatprep.subr.mxu0 0.0
      %612 = vmatpush1.msra.mxu0 %v518
      %613 = vmatprep.subr.mxu0 0.0
      %614 = vmatpush1.msra.mxu0 %v519
      %615 = vmatprep.subr.mxu0 0.0
      %616 = vmatpush1.msra.mxu0 %v520
      %617 = vmatprep.subr.mxu0 0.0
      %618 = vmatpush1.msra.mxu0 %v521
      %619 = vmatprep.subr.mxu0 0.0
      %620 = vmatpush1.msra.mxu0 %v522
      %621 = vmatprep.subr.mxu0 0.0
      %622 = vmatpush1.msra.mxu0 %v523
      %623 = vmatprep.subr.mxu0 0.0
      %624 = vmatpush1.msra.mxu0 %v524
      %625 = vmatprep.subr.mxu0 0.0
      %626 = vmatpush1.msra.mxu0 %v525
      %627 = vmatprep.subr.mxu0 0.0
      %628 = vmatpush1.msra.mxu0 %v526
      %629 = vmatprep.subr.mxu0 0.0
      %630 = vmatpush1.msra.mxu0 %v527
      %631 = vmatprep.subr.mxu0 0.0
      %632 = vmatpush1.msra.mxu0 %v528
      %633 = vmatprep.subr.mxu0 0.0
      %634 = vmatpush1.msra.mxu0 %v529
      %635 = vmatprep.subr.mxu0 0.0
      %636 = vmatpush1.msra.mxu0 %v530
      %637 = vmatprep.subr.mxu0 0.0
      %638 = vmatpush1.msra.mxu0 %v531
      %639 = vmatprep.subr.mxu0 0.0
      %640 = vmatpush1.msra.mxu0 0.0
      %641 = vmatprep.subr.mxu0 0.0
      %642 = vmatpush1.msra.mxu0 0.0
      %643 = vmatprep.subr.mxu0 0.0
      %644 = vmatpush1.msra.mxu0 0.0
      %645 = vmatprep.subr.mxu0 0.0
      %646 = vmatpush1.msra.mxu0 0.0
      %647 = vmatprep.subr.mxu0 0.0
      %648 = vmatpush1.msra.mxu0 0.0
      %649 = vmatprep.subr.mxu0 0.0
      %650 = vmatpush1.msra.mxu0 0.0
      %651 = vmatprep.subr.mxu0 0.0
      %652 = vmatpush1.msra.mxu0 0.0
      %653 = vmatprep.subr.mxu0 0.0
      %654 = vmatpush1.msra.mxu0 0.0
      %655 = vmatprep.subr.mxu0 0.0
      %656 = vmatpush1.msra.mxu0 0.0
      %657 = vmatprep.subr.mxu0 0.0
      %658 = vmatpush1.msra.mxu0 0.0
      %659 = vmatprep.subr.mxu0 0.0
      %660 = vmatpush1.msra.mxu0 0.0
      %661 = vmatprep.subr.mxu0 0.0
      %662 = vmatpush1.msra.mxu0 0.0
      %663 = vmatprep.subr.mxu0 0.0
      %664 = vmatpush1.msra.mxu0 0.0
      %665 = vmatprep.subr.mxu0 0.0
      %666 = vmatpush1.msra.mxu0 0.0
      %667 = vmatprep.subr.mxu0 0.0
      %668 = vmatpush1.msra.mxu0 0.0
      %669 = vmatprep.subr.mxu0 0.0
      %670 = vmatpush1.msra.mxu0 0.0
      %671 = vmatprep.mubr.f32.mxu0 0.0
      %672 = vmatmul.mubr.f32.gmra.mrb[0].mxu0 %v482
      %v673 = vpop.f32.mrb[0].mxu0
      %v674 = vadd.f32 %v599, %v673
      %v675 = vpop.f32.mrb[0].mxu0
      %676 = vmatprep.mubr.f32.mxu0 0.0
      %677 = vmatmul.mubr.f32.gmra.mrb[0].mxu0 %v483
      %v678 = vpop.f32.mrb[0].mxu0
      %v679 = vadd.f32 %v604, %v678
      %v680 = vpop.f32.mrb[0].mxu0
      %681 = vdwg.mxu0
      %v682 = vadd.f32 %v446, %v674
      %v683 = vadd.f32 %v452, %v679
      %684 = vst [vmem:[%s278] sm:$0xff] %v682
      %685 = vst [vmem:[%s278 + $0x8] sm:$0xff] %v683
      %p686 = scmp.lt.s32.totalorder %s18, 1
      %s687 = scalar_select %p686, %s18, 1
      %s688 = smul.addr %s687, 2
      %s689 = smul.addr %s688, 8
      %s690 = scalar_lea.vmem %s7, %s689
      // Predicated region
      $region49: #{identity_residual_block_forward.1} parent=47 // pred_check
        %p691 = pneg %p188
      $region50: #{identity_residual_block_forward.1} parent=47 // pred_check_branch
        %693 = sbr.rel (%p691) target = $region52
      $region51: #{identity_residual_block_forward.1} parent=47 // pred_region
        _
      $region52: #{identity_residual_block_forward.1} parent=47 // pred_fallthru
        _
    $region48: #{identity_residual_block_forward.1} parent=5 // pred_fallthru
      _
    %p694 = scmp.le.s32.totalorder 2, %s13
    // Predicated region
    $region53: #{identity_residual_block_forward.1} parent=5 // pred_check
      %p695 = pneg %p694
    $region54: #{identity_residual_block_forward.1} parent=5 // pred_check_branch
      %697 = sbr.rel (%p695) target = $region56
    $region55: #{identity_residual_block_forward.1} parent=5 // pred_region
      %s698 = ssub.s32 %s13, 2
      // Predicated region
      $region57: #{identity_residual_block_forward.1} parent=55 // pred_check
        %p699 = pneg %p194
      $region58: #{identity_residual_block_forward.1} parent=55 // pred_check_branch
        %701 = sbr.rel (%p699) target = $region60
      $region59: #{identity_residual_block_forward.1} parent=55 // pred_region
        %p702 = scmp.lt.s32.totalorder %s19, 1
        %s703 = scalar_select %p702, %s19, 1
        %s704 = smul.addr %s703, 2
        %s705 = smul.addr %s704, 8
        %s706 = scalar_lea.vmem %s7, %s705
      $region60: #{identity_residual_block_forward.1} parent=55 // pred_fallthru
        _
    $region56: #{identity_residual_block_forward.1} parent=5 // pred_fallthru
      _
  $region6: #{identity_residual_block_forward.1} parent=0 // loop_footer
    %s17 = sadd.s32 1, %s13
  $region7: #{identity_residual_block_forward.1} parent=0 // loop_footer_branch
    %12 = sbr.rel target = $region3
  $region8: #{identity_residual_block_forward.1} parent=0 // loop_exit
    _

</llo_original>
